<compile_context>
chip_gen: v7x
topology: tpu7x:2x2x1
jax: 0.10.0
libtpu: 0.0.40
codegen_flags: <defaults>
</compile_context>

<pallas_src>
import functools

import jax
import jax.numpy as jnp
from jax.experimental import pallas as pl
from jax.experimental.pallas import tpu as pltpu

_MIB = 1024 * 1024


def _cdiv(a: int, b: int) -> int:
    return -(-a // b)


def _round_up(x: int, m: int) -> int:
    return _cdiv(x, m) * m


@functools.lru_cache(maxsize=1)
def _physical_vmem_bytes() -> int:
    try:
        return int(pltpu.get_tpu_info().vmem_capacity_bytes)
    except Exception:
        return 64 * _MIB  # conservative default: v7x per-TensorCore VMEM


def _choose_tile_b(batch: int, target: int) -> int:
    """Batch tile: big (HBM roofline), multiple of 8, even grid when >1 tile."""
    tile_b = max(8, _round_up(min(target, batch), 8))
    num_tiles = _cdiv(batch, tile_b)
    if num_tiles > 1 and num_tiles % 2 == 1:
        num_tiles += 1  # even grid -> balanced megacore split on v7x (1 TC elsewhere)
    return max(8, _round_up(_cdiv(batch, num_tiles), 8))


# --------------------------------------------------------------------------- #
# Kernel
# --------------------------------------------------------------------------- #
def gated_tanh_kernel(x_ref, w_ref, b_ref, o_ref):
    """One batch tile: fused [tile_b, K] @ [K, 2*Npad] matmul + gated-tanh epilogue."""
    n_out = o_ref.shape[-1]          # true output width N (unpadded store)
    half = w_ref.shape[-1] // 2      # Npad: 128-aligned start of the gate columns

    x = x_ref[...]
    if x.dtype != w_ref.dtype:
        x = x.astype(w_ref.dtype)    # optional bf16 MXU path (see fuse_gated_tanh_params)

    # Single fused MXU matmul producing both pre-activations; accumulate in f32.
    acc = jnp.dot(x, w_ref[...], preferred_element_type=jnp.float32) + b_ref[...]

    f = jnp.tanh(acc[:, :n_out])                                  # forward branch (EUP)
    g = 0.5 * (jnp.tanh(0.5 * acc[:, half:half + n_out]) + 1.0)   # sigmoid via tanh: 1 EUP push
    o_ref[...] = (f * g).astype(o_ref.dtype)


# --------------------------------------------------------------------------- #
# Parameter fusion (do this ONCE at setup time, not per forward call)
# --------------------------------------------------------------------------- #
def fuse_gated_tanh_params(wf, bf, wg, bg, *, param_dtype=None):
    """Build the fused, lane-padded (forward | gate) weight/bias slabs.

    wf/wg: [K, N], bf/bg: [N]. Returns (w_fused [K, 2*Npad], b_fused [1, 2*Npad], N).
    param_dtype=jnp.bfloat16 opts into the bf16 MXU path (numerics tradeoff).
    """
    K, N = wf.shape
    assert wg.shape == (K, N) and bf.shape == (N,) and bg.shape == (N,)
    param_dtype = wf.dtype if param_dtype is None else jnp.dtype(param_dtype)

    n_pad = _round_up(max(N, 128), 128)   # keep each half 128-lane aligned
    w_fused = jnp.zeros((K, 2 * n_pad), dtype=param_dtype)
    w_fused = w_fused.at[:, :N].set(wf.astype(param_dtype))
    w_fused = w_fused.at[:, n_pad:n_pad + N].set(wg.astype(param_dtype))
    b_fused = jnp.zeros((1, 2 * n_pad), dtype=jnp.float32)
    b_fused = b_fused.at[0, :N].set(bf.astype(jnp.float32))
    b_fused = b_fused.at[0, n_pad:n_pad + N].set(bg.astype(jnp.float32))
    return w_fused, b_fused, N


# --------------------------------------------------------------------------- #
# Forward pass (hot path) on pre-fused params
# --------------------------------------------------------------------------- #
@functools.partial(jax.jit, static_argnames=("n_out", "target_tile_b"))
def gated_tanh_fused(x, w_fused, b_fused, *, n_out: int, target_tile_b: int = 1024):
    """x: [B, K]; w_fused: [K, 2*Npad]; b_fused: [1, 2*Npad]  ->  [B, n_out]."""
    B, K = x.shape
    Kw, two_n_pad = w_fused.shape
    assert Kw == K and two_n_pad % 256 == 0 and b_fused.shape == (1, two_n_pad)
    n_pad = two_n_pad // 2
    assert 0 < n_out <= n_pad

    in_b = jnp.dtype(x.dtype).itemsize
    w_b = jnp.dtype(w_fused.dtype).itemsize
    out_b = in_b

    # ---- Per-generation VMEM budget and batch-tile choice ----
    budget = min(int(0.8 * _physical_vmem_bytes()), 100 * _MIB)

    def footprint(tb: int) -> int:
        return (2 * tb * K * in_b            # double-buffered x tiles
                + 2 * tb * n_out * out_b     # double-buffered output tiles
                + K * two_n_pad * w_b        # single-buffered resident weights
                + two_n_pad * 4              # single-buffered resident bias (f32)
                + tb * two_n_pad * 4)        # f32 matmul accumulator / epilogue

    tile_b = _choose_tile_b(B, target_tile_b)
    while tile_b > 8 and footprint(tile_b) > budget:
        tile_b = max(8, _round_up(tile_b // 2, 8))
    needed = footprint(tile_b)
    # TODO(synk): if the resident fused-weight slab alone exceeds the budget (very
    # large K on v7x), add a K reduction grid axis ("arbitrary", f32 acc scratch)
    # instead of shrinking tile_b.
    vmem_limit = min(budget, max(_round_up(2 * needed, _MIB), 16 * _MIB))

    grid = (_cdiv(B, tile_b),)  # ragged last block: OOB reads discarded, writes dropped

    return pl.pallas_call(
        gated_tanh_kernel,
        out_shape=jax.ShapeDtypeStruct((B, n_out), x.dtype),
        grid_spec=pltpu.PrefetchScalarGridSpec(
            num_scalar_prefetch=0,
            grid=grid,
            in_specs=[
                # x: tiled along batch, full K on the lane axis.
                pl.BlockSpec((tile_b, K), lambda i: (i, 0)),
                # fused weights / bias: VMEM-resident, constant index_map ->
                # single buffer (second pipeline buffer would be wasted VMEM).
                pl.BlockSpec((K, two_n_pad), lambda i: (0, 0),
                             pipeline_mode=pl.Buffered(1)),
                pl.BlockSpec((1, two_n_pad), lambda i: (0, 0),
                             pipeline_mode=pl.Buffered(1)),
            ],
            # Unpadded output block (block == full lane dim is legal): avoids the
            # Npad/N writeback inflation and the wrapper-side [:, :N] slice pass.
            out_specs=pl.BlockSpec((tile_b, n_out), lambda i: (i, 0)),
        ),
        compiler_params=pltpu.CompilerParams(
            dimension_semantics=("parallel",),   # megacore sharding on v7x
            vmem_limit_bytes=vmem_limit,
        ),
    )(x, w_fused, b_fused)


def gated_tanh(x, wf, bf, wg, bg, *, target_tile_b: int = 1024, param_dtype=None):
    """One-shot convenience (re-fuses params every call).

    For repeated forward passes, call fuse_gated_tanh_params once and reuse
    gated_tanh_fused -- that keeps the weight fusion/padding off the hot path.
    """
    w_fused, b_fused, n_out = fuse_gated_tanh_params(wf, bf, wg, bg, param_dtype=param_dtype)
    return gated_tanh_fused(x, w_fused, b_fused, n_out=n_out, target_tile_b=target_tile_b)


def gated_tanh_ref(x, wf, bf, wg, bg):
    return jnp.tanh(x @ wf + bf) * jax.nn.sigmoid(x @ wg + bg)


if __name__ == "__main__":
    input_units = 32
    output_units = 16
    batch = 8

    key = jax.random.PRNGKey(0)
    kx, kwf, kbf, kwg, kbg = jax.random.split(key, 5)

    x = jax.random.normal(kx, (batch, input_units), dtype=jnp.float32)
    # PyTorch nn.Linear stores weight as [out, in]; we keep [in, out] for the kernel.
    bound = 1.0 / (input_units ** 0.5)
    wf = jax.random.uniform(kwf, (input_units, output_units), jnp.float32, -bound, bound)
    bf = jax.random.uniform(kbf, (output_units,), jnp.float32, -bound, bound)
    wg = jax.random.uniform(kwg, (input_units, output_units), jnp.float32, -bound, bound)
    bg = jax.random.uniform(kbg, (output_units,), jnp.float32, -bound, bound)

    # Recommended path: fuse/pad the params once, reuse across forward calls.
    w_fused, b_fused, n_out = fuse_gated_tanh_params(wf, bf, wg, bg)

    # Small-shape check (single batch tile).
    out = gated_tanh_fused(x, w_fused, b_fused, n_out=n_out)
    jax.block_until_ready(out)
    ref = gated_tanh_ref(x, wf, bf, wg, bg)
    assert out.shape == (batch, output_units)
    assert jnp.allclose(out, ref, atol=1e-5, rtol=1e-5)

    # Larger batch (not a multiple of the tile): exercises the ragged last block
    # and the even megacore grid split, with no wrapper-side pad copy or slice.
    big_batch = 1040
    xb = jax.random.normal(kx, (big_batch, input_units), dtype=jnp.float32)
    out_b = gated_tanh_fused(xb, w_fused, b_fused, n_out=n_out)
    jax.block_until_ready(out_b)
    ref_b = gated_tanh_ref(xb, wf, bf, wg, bg)
    assert out_b.shape == (big_batch, output_units)
    assert jnp.allclose(out_b, ref_b, atol=1e-5, rtol=1e-5)

    # Convenience one-shot wrapper also matches.
    out_c = gated_tanh(x, wf, bf, wg, bg)
    jax.block_until_ready(out_c)
    assert jnp.allclose(out_c, ref, atol=1e-5, rtol=1e-5)

    print("KERNEL_OK")
</pallas_src>

<mosaic_0001>
module attributes {stable_mosaic.version = 11 : i64} {
  func.func @gated_tanh_kernel(%arg0: i32, %arg1: memref<8x32xf32, #tpu.memory_space<vmem>>, %arg2: memref<32x256xf32, #tpu.memory_space<vmem>>, %arg3: memref<1x256xf32, #tpu.memory_space<vmem>>, %arg4: memref<8x16xf32, #tpu.memory_space<vmem>>) attributes {dimension_semantics = [#tpu.dimension_semantics<parallel>], iteration_bounds = array<i64: 1>, scalar_prefetch = 0 : i64, scratch_operands = 0 : i64, tpu.core_type = #tpu.core_type<tc>, window_params = [{transform_indices = @transform_0, window_bounds = array<i64: 8, 32>}, {pipeline_mode = #tpu.pipeline_mode<synchronous>, transform_indices = @transform_1, window_bounds = array<i64: 32, 256>}, {pipeline_mode = #tpu.pipeline_mode<synchronous>, transform_indices = @transform_2, window_bounds = array<i64: 1, 256>}, {transform_indices = @transform_3, window_bounds = array<i64: 8, 16>}]} {
    %c0 = arith.constant 0 : index
    %c0_0 = arith.constant 0 : index
    %0 = vector.load %arg1[%c0, %c0_0] : memref<8x32xf32, #tpu.memory_space<vmem>>, vector<8x32xf32>
    %c0_1 = arith.constant 0 : index
    %c0_2 = arith.constant 0 : index
    %1 = vector.load %arg2[%c0_1, %c0_2] : memref<32x256xf32, #tpu.memory_space<vmem>>, vector<32x256xf32>
    %cst = arith.constant dense<0.000000e+00> : vector<8x256xf32>
    %2 = tpu.matmul %0, %1, %cst {dimension_numbers = #tpu.dot_dimension_numbers<[1], [0], [0], [1], [0, 0, 1, 1], [], []>} : vector<8x32xf32>, vector<32x256xf32>, vector<8x256xf32> -> vector<8x256xf32>
    %c0_3 = arith.constant 0 : index
    %c0_4 = arith.constant 0 : index
    %3 = vector.load %arg3[%c0_3, %c0_4] : memref<1x256xf32, #tpu.memory_space<vmem>>, vector<1x256xf32>
    %4 = vector.broadcast %3 : vector<1x256xf32> to vector<8x256xf32>
    %5 = arith.addf %2, %4 : vector<8x256xf32>
    %6 = vector.extract_strided_slice %5 {offsets = [0, 0], sizes = [8, 16], strides = [1, 1]} : vector<8x256xf32> to vector<8x16xf32>
    %7 = math.tanh %6 : vector<8x16xf32>
    %8 = vector.extract_strided_slice %5 {offsets = [0, 128], sizes = [8, 16], strides = [1, 1]} : vector<8x256xf32> to vector<8x16xf32>
    %cst_5 = arith.constant 5.000000e-01 : f32
    %9 = vector.broadcast %cst_5 : f32 to vector<8x16xf32>
    %10 = arith.mulf %9, %8 : vector<8x16xf32>
    %11 = math.tanh %10 : vector<8x16xf32>
    %cst_6 = arith.constant 1.000000e+00 : f32
    %12 = vector.broadcast %cst_6 : f32 to vector<8x16xf32>
    %13 = arith.addf %11, %12 : vector<8x16xf32>
    %cst_7 = arith.constant 5.000000e-01 : f32
    %14 = vector.broadcast %cst_7 : f32 to vector<8x16xf32>
    %15 = arith.mulf %14, %13 : vector<8x16xf32>
    %16 = arith.mulf %7, %15 : vector<8x16xf32>
    %c0_8 = arith.constant 0 : index
    %c0_9 = arith.constant 0 : index
    %17 = vector.load %arg4[%c0_8, %c0_9] : memref<8x16xf32, #tpu.memory_space<vmem>>, vector<8x16xf32>
    tpu.vector_store %arg4[%c0_8, %c0_9], %16 {strides = array<i32>} : memref<8x16xf32, #tpu.memory_space<vmem>>, vector<8x16xf32>,
    return
  }
  func.func @transform_0(%arg0: i32) -> (i32, i32) {
    %c0_i32 = arith.constant 0 : i32
    %c0_i32_0 = arith.constant 0 : i32
    return %arg0, %c0_i32 : i32, i32
  }
  func.func @transform_1(%arg0: i32) -> (i32, i32) {
    %c0_i32 = arith.constant 0 : i32
    %c0_i32_0 = arith.constant 0 : i32
    %c0_i32_1 = arith.constant 0 : i32
    return %c0_i32, %c0_i32_0 : i32, i32
  }
  func.func @transform_2(%arg0: i32) -> (i32, i32) {
    %c0_i32 = arith.constant 0 : i32
    %c0_i32_0 = arith.constant 0 : i32
    %c0_i32_1 = arith.constant 0 : i32
    return %c0_i32, %c0_i32_0 : i32, i32
  }
  func.func @transform_3(%arg0: i32) -> (i32, i32) {
    %c0_i32 = arith.constant 0 : i32
    %c0_i32_0 = arith.constant 0 : i32
    return %arg0, %c0_i32 : i32, i32
  }
}

</mosaic_0001>

<llo_original>
// kernel: gated_tanh_fused.1
$region0: #{gated_tanh_fused.1}
  #allocation0 [shape = 'u32[]', space=smem, size = 0x4, offset = 0x4, fixed_abs, tag = 'smem constant byte address 0x4 - core index']
  #allocation1 [shape = 'u32[144,128]{1,0:T(1,128)}', space=vmem, size = 0x12000, scoped, tag = 'internal scratch']
  %s0 = inlined_call_operand.hbm [shape: f32[8,32], index: 0, kind: input, shape index: {}]
  %s1 = inlined_call_operand.hbm [shape: f32[32,256], index: 1, kind: input, shape index: {}]
  %s2 = inlined_call_operand.vmem [shape: f32[1,256], index: 2, kind: input, shape index: {}]
  %s3 = inlined_call_operand.hbm [shape: f32[8,16], index: 3, kind: output, shape index: {}]
  %s4 = sld [smem:[#allocation0]]
  $region30: #{gated_tanh_fused.1} parent=0
    _
  %s6 = ssub.s32 1, %s4
  %s7 = scalar_select 0, %s6, %s4
  $region1: #{gated_tanh_fused.1} parent=0
    #allocation2 [shape = 'u8[4096]{0}', space=vmem, size = 0x1000, scoped, tag = 'input window, operand 0, single buffered']
    #allocation3 [shape = 's32[1]{0}', space=sflag, size = 0x4, scoped, tag = 'scoped memory for gated_tanh_fused.1']
    #allocation4 [shape = 's32[1]{0}', space=sflag, size = 0x4, scoped, tag = 'scoped memory for gated_tanh_fused.1']
    #allocation5 [shape = 'u8[32768]{0}', space=vmem, size = 0x8000, scoped, tag = 'input window, operand 1, single buffered']
    #allocation6 [shape = 's32[1]{0}', space=sflag, size = 0x4, scoped, tag = 'scoped memory for gated_tanh_fused.1']
    #allocation7 [shape = 'u8[4096]{0}', space=vmem, size = 0x1000, scoped, tag = 'output window, operand 0, single buffered']
    %8 = vsyncpa [#allocation3], 0
    %9 = vsyncpa [#allocation6], 0
    %10 = vsyncpa [#allocation4], 0
    // Predicated region
    $region2: #{gated_tanh_fused.1} parent=1 // pred_check
      _
    $region3: #{gated_tanh_fused.1} parent=1 // pred_check_branch
      %12 = sbr.rel (0) target = $region5
    $region4: #{gated_tanh_fused.1} parent=1 // pred_region
      %s14 = ssub.s32 128, 128
      %15 = vsyncadd [#allocation3], %s14
      %s17 = sshll.u32 [#allocation2], 4
      %s18 = int_to_ptr.vmem [resolvable:$true] %s17
      %20 = dma.hbm_to_vmem [thread:$0]  %s0, 128, %s18, [#allocation3]
    $region5: #{gated_tanh_fused.1} parent=1 // pred_fallthru
      _
    // Predicated region
    $region6: #{gated_tanh_fused.1} parent=1 // pred_check
      _
    $region7: #{gated_tanh_fused.1} parent=1 // pred_check_branch
      %22 = sbr.rel (0) target = $region9
    $region8: #{gated_tanh_fused.1} parent=1 // pred_region
      %s24 = ssub.s32 1024, 1024
      %25 = vsyncadd [#allocation6], %s24
      %s26 = sshll.u32 [#allocation5], 4
      %s27 = int_to_ptr.vmem [resolvable:$true] %s26
      %32 = dma.hbm_to_vmem [thread:$0]  %s1, 1024, %s27, [#allocation6], 256, 256, 16
    $region9: #{gated_tanh_fused.1} parent=1 // pred_fallthru
      _
    // Predicated region
    $region10: #{gated_tanh_fused.1} parent=1 // pred_check
      _
    $region11: #{gated_tanh_fused.1} parent=1 // pred_check_branch
      %34 = sbr.rel (0) target = $region13
    $region12: #{gated_tanh_fused.1} parent=1 // pred_region
      _
    $region13: #{gated_tanh_fused.1} parent=1 // pred_fallthru
      _
    // Predicated region
    $region14: #{gated_tanh_fused.1} parent=1 // pred_check
      _
    $region15: #{gated_tanh_fused.1} parent=1 // pred_check_branch
      %36 = sbr.rel (0) target = $region17
    $region16: #{gated_tanh_fused.1} parent=1 // pred_region
      %37 = dma.done [#allocation3], 128
    $region17: #{gated_tanh_fused.1} parent=1 // pred_fallthru
      _
    // Predicated region
    $region18: #{gated_tanh_fused.1} parent=1 // pred_check
      _
    $region19: #{gated_tanh_fused.1} parent=1 // pred_check_branch
      %39 = sbr.rel (0) target = $region21
    $region20: #{gated_tanh_fused.1} parent=1 // pred_region
      %40 = dma.done [#allocation6], 1024
    $region21: #{gated_tanh_fused.1} parent=1 // pred_fallthru
      _
    %v41 = vld [vmem:[#allocation2] sm:$0xff]
    %v42 = vld [vmem:[#allocation5] sm:$0xff]
    %v43 = vld [vmem:[#allocation5 + $0x8] sm:$0xff]
    %v44 = vld [vmem:[#allocation5 + $0x10] sm:$0xff]
    %v45 = vld [vmem:[#allocation5 + $0x18] sm:$0xff]
    %v46 = vld [vmem:[#allocation5 + $0x20] sm:$0xff]
    %v47 = vld [vmem:[#allocation5 + $0x28] sm:$0xff]
    %v48 = vld [vmem:[#allocation5 + $0x30] sm:$0xff]
    %v49 = vld [vmem:[#allocation5 + $0x38] sm:$0xff]
    %v50 = vld [vmem:[%s2] sm:$0x3]
    %v52 = vlaneseq
    %v53 = vshrl.u32 %v52, 7
    %v54 = vsub.s32 0, %v53
    %v55 = vrot.slane %v50, %v54
    %v56 = vlaneseq
    %v57 = vshrl.u32 %v56, 7
    %v58 = vsub.s32 1, %v57
    %v59 = vrot.slane %v50, %v58
    %vm62 = vcmask 261120
    %v64 = vsel %vm62, %v41, 0
    %66 = vmatprep.subr.mxu0 %v43
    %67 = vmatpush1.msra.mxu0 %v42
    %68 = vmatprep.subr.mxu0 %v45
    %69 = vmatpush1.msra.mxu0 %v44
    %70 = vmatprep.subr.mxu0 %v47
    %71 = vmatpush1.msra.mxu0 %v46
    %72 = vmatprep.subr.mxu0 %v49
    %73 = vmatpush1.msra.mxu0 %v48
    %74 = vmatprep.subr.mxu0 0.0
    %75 = vmatpush1.msra.mxu0 0.0
    %76 = vmatprep.subr.mxu0 0.0
    %77 = vmatpush1.msra.mxu0 0.0
    %78 = vmatprep.subr.mxu0 0.0
    %79 = vmatpush1.msra.mxu0 0.0
    %80 = vmatprep.subr.mxu0 0.0
    %81 = vmatpush1.msra.mxu0 0.0
    %82 = vmatprep.subr.mxu0 0.0
    %83 = vmatpush1.msra.mxu0 0.0
    %84 = vmatprep.subr.mxu0 0.0
    %85 = vmatpush1.msra.mxu0 0.0
    %86 = vmatprep.subr.mxu0 0.0
    %87 = vmatpush1.msra.mxu0 0.0
    %88 = vmatprep.subr.mxu0 0.0
    %89 = vmatpush1.msra.mxu0 0.0
    %90 = vmatprep.subr.mxu0 0.0
    %91 = vmatpush1.msra.mxu0 0.0
    %92 = vmatprep.subr.mxu0 0.0
    %93 = vmatpush1.msra.mxu0 0.0
    %94 = vmatprep.subr.mxu0 0.0
    %95 = vmatpush1.msra.mxu0 0.0
    %96 = vmatprep.subr.mxu0 0.0
    %97 = vmatpush1.msra.mxu0 0.0
    %98 = vmatprep.subr.mxu0 0.0
    %99 = vmatpush1.msra.mxu0 0.0
    %100 = vmatprep.subr.mxu0 0.0
    %101 = vmatpush1.msra.mxu0 0.0
    %102 = vmatprep.subr.mxu0 0.0
    %103 = vmatpush1.msra.mxu0 0.0
    %104 = vmatprep.subr.mxu0 0.0
    %105 = vmatpush1.msra.mxu0 0.0
    %106 = vmatprep.subr.mxu0 0.0
    %107 = vmatpush1.msra.mxu0 0.0
    %108 = vmatprep.subr.mxu0 0.0
    %109 = vmatpush1.msra.mxu0 0.0
    %110 = vmatprep.subr.mxu0 0.0
    %111 = vmatpush1.msra.mxu0 0.0
    %112 = vmatprep.subr.mxu0 0.0
    %113 = vmatpush1.msra.mxu0 0.0
    %114 = vmatprep.subr.mxu0 0.0
    %115 = vmatpush1.msra.mxu0 0.0
    %116 = vmatprep.subr.mxu0 0.0
    %117 = vmatpush1.msra.mxu0 0.0
    %118 = vmatprep.subr.mxu0 0.0
    %119 = vmatpush1.msra.mxu0 0.0
    %120 = vmatprep.subr.mxu0 0.0
    %121 = vmatpush1.msra.mxu0 0.0
    %122 = vmatprep.subr.mxu0 0.0
    %123 = vmatpush1.msra.mxu0 0.0
    %124 = vmatprep.subr.mxu0 0.0
    %125 = vmatpush1.msra.mxu0 0.0
    %126 = vmatprep.subr.mxu0 0.0
    %127 = vmatpush1.msra.mxu0 0.0
    %128 = vmatprep.subr.mxu0 0.0
    %129 = vmatpush1.msra.mxu0 0.0
    %130 = vmatprep.mubr.f32.mxu0 0.0
    %131 = vmatmul.mubr.f32.gmra.mrb[0].mxu0 %v64
    %v132 = vpop.f32.mrb[0].mxu0
    %v133 = vadd.f32 %v55, %v132
    %v134 = vpop.f32.mrb[0].mxu0
    %v135 = vadd.f32 %v59, %v134
    %136 = vdwg.mxu0
    %v137 = vtanh.pop %v133
    %v138 = vmul.f32 %v135, 0.5
    %v139 = vtanh.pop %v138
    %v140 = vadd.f32 %v139, 1.0
    %v141 = vmul.f32 %v140, 0.5
    %v142 = vmul.f32 %v137, %v141
    %vm143 = vcmask 130048
    %144 = vst.msk [vmem:[#allocation7] sm:$0xff] %vm143, %v142
    // Predicated region
    $region22: #{gated_tanh_fused.1} parent=1 // pred_check
      _
    $region23: #{gated_tanh_fused.1} parent=1 // pred_check_branch
      %146 = sbr.rel (0) target = $region25
    $region24: #{gated_tanh_fused.1} parent=1 // pred_region
      %s148 = ssub.s32 128, 128
      %149 = vsyncadd [#allocation4], %s148
      %s151 = sshll.u32 [#allocation7], 4
      %s152 = int_to_ptr.vmem [resolvable:$true] %s151
      %154 = dma.vmem_to_hbm [thread:$0]  %s152, 128, %s3, [#allocation4]
    $region25: #{gated_tanh_fused.1} parent=1 // pred_fallthru
      _
    // Predicated region
    $region26: #{gated_tanh_fused.1} parent=1 // pred_check
      _
    $region27: #{gated_tanh_fused.1} parent=1 // pred_check_branch
      %156 = sbr.rel (0) target = $region29
    $region28: #{gated_tanh_fused.1} parent=1 // pred_region
      %157 = dma.done [#allocation4], 128
    $region29: #{gated_tanh_fused.1} parent=1 // pred_fallthru
      _
    %158 = vsyncpa [#allocation3], 1
    %159 = vsyncpa [#allocation6], 1
    %160 = vsyncpa [#allocation4], 1

</llo_original>
